<compile_context>
chip_gen: v6e
topology: v6e:2x2x1
jax: 0.10.0
libtpu: 0.0.40
codegen_flags: <defaults>
</compile_context>

<pallas_src>
import functools

import jax
import jax.numpy as jnp
import numpy as np
from jax.experimental import pallas as pl
from jax.experimental.pallas import tpu as pltpu

LATENT = 32
C_IN = 5


def _softplus(z):
    # Matches torch.nn.Softplus(beta=1, threshold=20).
    return jnp.where(z > 20.0, z, jnp.log1p(jnp.exp(jnp.minimum(z, 20.0))))


def mdn_kernel(x_ref,
               w1_ref, b1_ref, w2_ref, b2_ref, w3_ref, b3_ref,
               wh_ref, bh_ref,
               out_ref, *, K):
    """x_ref: (5, tn)  weights: (C_out, C_in)  biases: (C_out, 1)
    out_ref: (9K, tn) laid out as [mu(3K) | sigma(3K) | pi(3K)],
    each 3K block ordered [red K, green K, blue K]."""
    x = x_ref[...]                                               # (5, tn)

    # Backbone: three 1x1 convs (matmuls over the channel/sublane dim) + ReLU.
    h = jnp.dot(w1_ref[...], x, preferred_element_type=jnp.float32) + b1_ref[...]
    h = jnp.maximum(h, 0.0)
    h = jnp.dot(w2_ref[...], h, preferred_element_type=jnp.float32) + b2_ref[...]
    h = jnp.maximum(h, 0.0)
    h = jnp.dot(w3_ref[...], h, preferred_element_type=jnp.float32) + b3_ref[...]
    h = jnp.maximum(h, 0.0)                                      # (32, tn)

    # One fused head matmul for all 9 heads: (9K, 32) @ (32, tn) -> (9K, tn).
    y = jnp.dot(wh_ref[...], h, preferred_element_type=jnp.float32) + bh_ref[...]

    # mu heads: residual add of the matching input channel (0/1/2), slice-wise.
    for c in range(3):
        out_ref[c * K:(c + 1) * K, :] = y[c * K:(c + 1) * K, :] + x[c:c + 1, :]

    # sigma heads: Softplus.
    out_ref[3 * K:6 * K, :] = _softplus(y[3 * K:6 * K, :])

    # pi heads: Softmax over the K mixture components (channel dim), per group.
    for c in range(3):
        lo = 6 * K + c * K
        g = y[lo:lo + K, :]
        g = g - jnp.max(g, axis=0, keepdims=True)
        e = jnp.exp(g)
        inv = pl.reciprocal(jnp.sum(e, axis=0, keepdims=True))   # exact
        out_ref[lo:lo + K, :] = e * inv


def _pick_tile(hw, max_tile):
    for t in (max_tile, 2048, 1024, 512, 256, 128):
        if t <= hw and hw % t == 0:
            return t
    return hw  # full-row block (block dim == full array dim is always legal)


def mdn_forward_pallas(x_nchw, params, K, max_tile=2048):
    B, c_in, H, W = x_nchw.shape
    assert c_in == C_IN
    HW = H * W
    tile = _pick_tile(HW, max_tile)
    n_tiles = HW // tile

    # NCHW -> (B, 5, H*W): pure reshape, no HBM transpose pass.
    x3 = x_nchw.reshape(B, C_IN, HW)

    (w1, b1, w2, b2, w3, b3, wh, bh) = params
    full = lambda a: pl.BlockSpec(a.shape, lambda b, i: (0,) * a.ndim)

    grid_spec = pltpu.PrefetchScalarGridSpec(
        num_scalar_prefetch=0,
        grid=(B, n_tiles),
        in_specs=[
            pl.BlockSpec((None, C_IN, tile), lambda b, i: (b, 0, i)),
            full(w1), full(b1),
            full(w2), full(b2),
            full(w3), full(b3),
            full(wh), full(bh),
        ],
        out_specs=pl.BlockSpec((None, 9 * K, tile), lambda b, i: (b, 0, i)),
    )

    N = B * HW
    cost = pl.CostEstimate(
        flops=2 * N * (C_IN * LATENT + 2 * LATENT * LATENT + LATENT * 9 * K),
        transcendentals=N * 9 * K,
        bytes_accessed=4 * (N * (C_IN + 9 * K)
                            + w1.size + w2.size + w3.size + wh.size
                            + b1.size + b2.size + b3.size + bh.size),
    )

    out = pl.pallas_call(
        functools.partial(mdn_kernel, K=K),
        out_shape=jax.ShapeDtypeStruct((B, 9 * K, HW), jnp.float32),
        grid_spec=grid_spec,
        compiler_params=pltpu.CompilerParams(
            dimension_semantics=("parallel", "parallel")),
        cost_estimate=cost,
    )(x3, w1, b1, w2, b2, w3, b3, wh, bh)

    # (B, 9K, HW) -> nine NCHW tensors via reshape + contiguous channel slices
    # (no transposes needed: channel axis is already axis 1).
    out = out.reshape(B, 9 * K, H, W)
    mu = out[:, 0:3 * K]
    sigma = out[:, 3 * K:6 * K]
    pi = out[:, 6 * K:9 * K]
    outs = []
    for c in range(3):  # red, green, blue
        outs += [mu[:, c * K:(c + 1) * K],
                 sigma[:, c * K:(c + 1) * K],
                 pi[:, c * K:(c + 1) * K]]
    return tuple(outs)


def init_params(key, K):
    """Deterministic synthetic init.  Weights stored as (C_out, C_in) matrices,
    biases as (C_out, 1), matching the channels-on-sublane kernel layout.
    The 9 heads are fused into one (9K, 32) weight / (9K, 1) bias in the order
    [mu_r, mu_g, mu_b, sig_r, sig_g, sig_b, pi_r, pi_g, pi_b]."""
    ks = jax.random.split(key, 24)
    i = iter(range(24))

    def lin(kw, kb, cin, cout):
        w = 0.2 * jax.random.normal(kw, (cout, cin), jnp.float32)
        b = 0.1 * jax.random.normal(kb, (cout, 1), jnp.float32)
        return w, b

    w1, b1 = lin(ks[next(i)], ks[next(i)], C_IN, LATENT)
    w2, b2 = lin(ks[next(i)], ks[next(i)], LATENT, LATENT)
    w3, b3 = lin(ks[next(i)], ks[next(i)], LATENT, LATENT)

    head_ws, head_bs = [], []
    for _ in range(9):  # mu_rgb, sigma_rgb, pi_rgb
        w, b = lin(ks[next(i)], ks[next(i)], LATENT, K)
        head_ws.append(w)
        head_bs.append(b)
    wh = jnp.concatenate(head_ws, axis=0)  # (9K, 32)
    bh = jnp.concatenate(head_bs, axis=0)  # (9K, 1)
    return (w1, b1, w2, b2, w3, b3, wh, bh)


def mdn_forward_ref(x_nchw, params, K):
    """Pure-JAX reference matching the PyTorch forward (pixels-as-rows layout)."""
    (w1, b1, w2, b2, w3, b3, wh, bh) = params
    B, _, H, W = x_nchw.shape
    xf = jnp.transpose(x_nchw, (0, 2, 3, 1)).reshape(-1, C_IN)   # (N, 5)
    h = jnp.maximum(xf @ w1.T + b1.T, 0.0)
    h = jnp.maximum(h @ w2.T + b2.T, 0.0)
    h = jnp.maximum(h @ w3.T + b3.T, 0.0)
    y = h @ wh.T + bh.T                                          # (N, 9K)

    mu = y[:, :3 * K] + jnp.repeat(xf[:, :3], K, axis=1)
    sigma = jax.nn.softplus(y[:, 3 * K:6 * K])
    logits = y[:, 6 * K:9 * K]
    pis = [jax.nn.softmax(logits[:, c * K:(c + 1) * K], axis=-1) for c in range(3)]

    def to_nchw(a):  # (N, K) -> (B, K, H, W)
        return jnp.transpose(a.reshape(B, H, W, K), (0, 3, 1, 2))

    outs = []
    for c in range(3):
        outs += [to_nchw(mu[:, c * K:(c + 1) * K]),
                 to_nchw(sigma[:, c * K:(c + 1) * K]),
                 to_nchw(pis[c])]
    return tuple(outs)


if __name__ == "__main__":
    K = 4
    B, H, W = 2, 16, 16  # HW = 256 -> one 256-lane tile per batch, grid (2, 1)

    key = jax.random.PRNGKey(0)
    kx, kp = jax.random.split(key)
    x = jax.random.normal(kx, (B, C_IN, H, W), jnp.float32)
    params = init_params(kp, K)

    outs = mdn_forward_pallas(x, params, K)
    outs = jax.block_until_ready(outs)

    refs = mdn_forward_ref(x, params, K)
    for o, r in zip(outs, refs):
        assert o.shape == (B, K, H, W)
        np.testing.assert_allclose(np.asarray(o), np.asarray(r), rtol=1e-5, atol=1e-5)

    print("KERNEL_OK")
</pallas_src>

<mosaic_0001>
module attributes {stable_mosaic.version = 11 : i64} {
  func.func @mdn_kernel(%arg0: i32, %arg1: i32, %arg2: memref<1x5x256xf32, #tpu.memory_space<vmem>>, %arg3: memref<32x5xf32, #tpu.memory_space<vmem>>, %arg4: memref<32x1xf32, #tpu.memory_space<vmem>>, %arg5: memref<32x32xf32, #tpu.memory_space<vmem>>, %arg6: memref<32x1xf32, #tpu.memory_space<vmem>>, %arg7: memref<32x32xf32, #tpu.memory_space<vmem>>, %arg8: memref<32x1xf32, #tpu.memory_space<vmem>>, %arg9: memref<36x32xf32, #tpu.memory_space<vmem>>, %arg10: memref<36x1xf32, #tpu.memory_space<vmem>>, %arg11: memref<1x36x256xf32, #tpu.memory_space<vmem>>) attributes {dimension_semantics = [#tpu.dimension_semantics<parallel>, #tpu.dimension_semantics<parallel>], iteration_bounds = array<i64: 2, 1>, scalar_prefetch = 0 : i64, scratch_operands = 0 : i64, tpu.core_type = #tpu.core_type<tc>, window_params = [{transform_indices = @transform_0, window_bounds = array<i64: 1, 5, 256>}, {pipeline_mode = #tpu.pipeline_mode<synchronous>, transform_indices = @transform_1, window_bounds = array<i64: 32, 5>}, {pipeline_mode = #tpu.pipeline_mode<synchronous>, transform_indices = @transform_2, window_bounds = array<i64: 32, 1>}, {pipeline_mode = #tpu.pipeline_mode<synchronous>, transform_indices = @transform_3, window_bounds = array<i64: 32, 32>}, {pipeline_mode = #tpu.pipeline_mode<synchronous>, transform_indices = @transform_4, window_bounds = array<i64: 32, 1>}, {pipeline_mode = #tpu.pipeline_mode<synchronous>, transform_indices = @transform_5, window_bounds = array<i64: 32, 32>}, {pipeline_mode = #tpu.pipeline_mode<synchronous>, transform_indices = @transform_6, window_bounds = array<i64: 32, 1>}, {pipeline_mode = #tpu.pipeline_mode<synchronous>, transform_indices = @transform_7, window_bounds = array<i64: 36, 32>}, {pipeline_mode = #tpu.pipeline_mode<synchronous>, transform_indices = @transform_8, window_bounds = array<i64: 36, 1>}, {transform_indices = @transform_9, window_bounds = array<i64: 1, 36, 256>}]} {
    %c0 = arith.constant 0 : index
    %c0_0 = arith.constant 0 : index
    %c0_1 = arith.constant 0 : index
    %0 = vector.load %arg2[%c0, %c0_0, %c0_1] : memref<1x5x256xf32, #tpu.memory_space<vmem>>, vector<1x5x256xf32>
    %1 = vector.shape_cast %0 : vector<1x5x256xf32> to vector<5x256xf32>
    %c0_2 = arith.constant 0 : index
    %c0_3 = arith.constant 0 : index
    %2 = vector.load %arg3[%c0_2, %c0_3] : memref<32x5xf32, #tpu.memory_space<vmem>>, vector<32x5xf32>
    %cst = arith.constant dense<0.000000e+00> : vector<32x256xf32>
    %3 = tpu.matmul %2, %1, %cst {dimension_numbers = #tpu.dot_dimension_numbers<[1], [0], [0], [1], [0, 0, 1, 1], [], []>} : vector<32x5xf32>, vector<5x256xf32>, vector<32x256xf32> -> vector<32x256xf32>
    %c0_4 = arith.constant 0 : index
    %c0_5 = arith.constant 0 : index
    %4 = vector.load %arg4[%c0_4, %c0_5] : memref<32x1xf32, #tpu.memory_space<vmem>>, vector<32x1xf32>
    %5 = vector.broadcast %4 : vector<32x1xf32> to vector<32x256xf32>
    %6 = arith.addf %3, %5 : vector<32x256xf32>
    %cst_6 = arith.constant 0.000000e+00 : f32
    %7 = vector.broadcast %cst_6 : f32 to vector<32x256xf32>
    %8 = arith.maximumf %6, %7 : vector<32x256xf32>
    %c0_7 = arith.constant 0 : index
    %c0_8 = arith.constant 0 : index
    %9 = vector.load %arg5[%c0_7, %c0_8] : memref<32x32xf32, #tpu.memory_space<vmem>>, vector<32x32xf32>
    %cst_9 = arith.constant dense<0.000000e+00> : vector<32x256xf32>
    %10 = tpu.matmul %9, %8, %cst_9 {dimension_numbers = #tpu.dot_dimension_numbers<[1], [0], [0], [1], [0, 0, 1, 1], [], []>} : vector<32x32xf32>, vector<32x256xf32>, vector<32x256xf32> -> vector<32x256xf32>
    %c0_10 = arith.constant 0 : index
    %c0_11 = arith.constant 0 : index
    %11 = vector.load %arg6[%c0_10, %c0_11] : memref<32x1xf32, #tpu.memory_space<vmem>>, vector<32x1xf32>
    %12 = vector.broadcast %11 : vector<32x1xf32> to vector<32x256xf32>
    %13 = arith.addf %10, %12 : vector<32x256xf32>
    %cst_12 = arith.constant 0.000000e+00 : f32
    %14 = vector.broadcast %cst_12 : f32 to vector<32x256xf32>
    %15 = arith.maximumf %13, %14 : vector<32x256xf32>
    %c0_13 = arith.constant 0 : index
    %c0_14 = arith.constant 0 : index
    %16 = vector.load %arg7[%c0_13, %c0_14] : memref<32x32xf32, #tpu.memory_space<vmem>>, vector<32x32xf32>
    %cst_15 = arith.constant dense<0.000000e+00> : vector<32x256xf32>
    %17 = tpu.matmul %16, %15, %cst_15 {dimension_numbers = #tpu.dot_dimension_numbers<[1], [0], [0], [1], [0, 0, 1, 1], [], []>} : vector<32x32xf32>, vector<32x256xf32>, vector<32x256xf32> -> vector<32x256xf32>
    %c0_16 = arith.constant 0 : index
    %c0_17 = arith.constant 0 : index
    %18 = vector.load %arg8[%c0_16, %c0_17] : memref<32x1xf32, #tpu.memory_space<vmem>>, vector<32x1xf32>
    %19 = vector.broadcast %18 : vector<32x1xf32> to vector<32x256xf32>
    %20 = arith.addf %17, %19 : vector<32x256xf32>
    %cst_18 = arith.constant 0.000000e+00 : f32
    %21 = vector.broadcast %cst_18 : f32 to vector<32x256xf32>
    %22 = arith.maximumf %20, %21 : vector<32x256xf32>
    %c0_19 = arith.constant 0 : index
    %c0_20 = arith.constant 0 : index
    %23 = vector.load %arg9[%c0_19, %c0_20] : memref<36x32xf32, #tpu.memory_space<vmem>>, vector<36x32xf32>
    %cst_21 = arith.constant dense<0.000000e+00> : vector<36x256xf32>
    %24 = tpu.matmul %23, %22, %cst_21 {dimension_numbers = #tpu.dot_dimension_numbers<[1], [0], [0], [1], [0, 0, 1, 1], [], []>} : vector<36x32xf32>, vector<32x256xf32>, vector<36x256xf32> -> vector<36x256xf32>
    %c0_22 = arith.constant 0 : index
    %c0_23 = arith.constant 0 : index
    %25 = vector.load %arg10[%c0_22, %c0_23] : memref<36x1xf32, #tpu.memory_space<vmem>>, vector<36x1xf32>
    %26 = vector.broadcast %25 : vector<36x1xf32> to vector<36x256xf32>
    %27 = arith.addf %24, %26 : vector<36x256xf32>
    %28 = vector.extract_strided_slice %27 {offsets = [0, 0], sizes = [4, 256], strides = [1, 1]} : vector<36x256xf32> to vector<4x256xf32>
    %29 = vector.extract_strided_slice %1 {offsets = [0, 0], sizes = [1, 256], strides = [1, 1]} : vector<5x256xf32> to vector<1x256xf32>
    %30 = vector.broadcast %29 : vector<1x256xf32> to vector<4x256xf32>
    %31 = arith.addf %28, %30 : vector<4x256xf32>
    %c0_24 = arith.constant 0 : index
    %c0_25 = arith.constant 0 : index
    %c0_26 = arith.constant 0 : index
    %32 = vector.load %arg11[%c0_24, %c0_25, %c0_26] : memref<1x36x256xf32, #tpu.memory_space<vmem>>, vector<1x4x256xf32>
    %33 = vector.shape_cast %32 : vector<1x4x256xf32> to vector<4x256xf32>
    %34 = vector.shape_cast %31 : vector<4x256xf32> to vector<1x4x256xf32>
    tpu.vector_store %arg11[%c0_24, %c0_25, %c0_26], %34 {strides = array<i32>} : memref<1x36x256xf32, #tpu.memory_space<vmem>>, vector<1x4x256xf32>,
    %35 = vector.extract_strided_slice %27 {offsets = [4, 0], sizes = [4, 256], strides = [1, 1]} : vector<36x256xf32> to vector<4x256xf32>
    %36 = vector.extract_strided_slice %1 {offsets = [1, 0], sizes = [1, 256], strides = [1, 1]} : vector<5x256xf32> to vector<1x256xf32>
    %37 = vector.broadcast %36 : vector<1x256xf32> to vector<4x256xf32>
    %38 = arith.addf %35, %37 : vector<4x256xf32>
    %c0_27 = arith.constant 0 : index
    %c4 = arith.constant 4 : index
    %c0_28 = arith.constant 0 : index
    %39 = vector.load %arg11[%c0_27, %c4, %c0_28] : memref<1x36x256xf32, #tpu.memory_space<vmem>>, vector<1x4x256xf32>
    %40 = vector.shape_cast %39 : vector<1x4x256xf32> to vector<4x256xf32>
    %41 = vector.shape_cast %38 : vector<4x256xf32> to vector<1x4x256xf32>
    tpu.vector_store %arg11[%c0_27, %c4, %c0_28], %41 {strides = array<i32>} : memref<1x36x256xf32, #tpu.memory_space<vmem>>, vector<1x4x256xf32>,
    %42 = vector.extract_strided_slice %27 {offsets = [8, 0], sizes = [4, 256], strides = [1, 1]} : vector<36x256xf32> to vector<4x256xf32>
    %43 = vector.extract_strided_slice %1 {offsets = [2, 0], sizes = [1, 256], strides = [1, 1]} : vector<5x256xf32> to vector<1x256xf32>
    %44 = vector.broadcast %43 : vector<1x256xf32> to vector<4x256xf32>
    %45 = arith.addf %42, %44 : vector<4x256xf32>
    %c0_29 = arith.constant 0 : index
    %c8 = arith.constant 8 : index
    %c0_30 = arith.constant 0 : index
    %46 = vector.load %arg11[%c0_29, %c8, %c0_30] : memref<1x36x256xf32, #tpu.memory_space<vmem>>, vector<1x4x256xf32>
    %47 = vector.shape_cast %46 : vector<1x4x256xf32> to vector<4x256xf32>
    %48 = vector.shape_cast %45 : vector<4x256xf32> to vector<1x4x256xf32>
    tpu.vector_store %arg11[%c0_29, %c8, %c0_30], %48 {strides = array<i32>} : memref<1x36x256xf32, #tpu.memory_space<vmem>>, vector<1x4x256xf32>,
    %49 = vector.extract_strided_slice %27 {offsets = [12, 0], sizes = [12, 256], strides = [1, 1]} : vector<36x256xf32> to vector<12x256xf32>
    %cst_31 = arith.constant 2.000000e+01 : f32
    %50 = vector.broadcast %cst_31 : f32 to vector<12x256xf32>
    %51 = arith.cmpf ogt, %49, %50 : vector<12x256xf32>
    %cst_32 = arith.constant 2.000000e+01 : f32
    %52 = vector.broadcast %cst_32 : f32 to vector<12x256xf32>
    %53 = arith.minimumf %49, %52 : vector<12x256xf32>
    %54 = math.exp %53 : vector<12x256xf32>
    %55 = math.log1p %54 : vector<12x256xf32>
    %56 = arith.select %51, %49, %55 : vector<12x256xi1>, vector<12x256xf32>
    %c0_33 = arith.constant 0 : index
    %c12 = arith.constant 12 : index
    %c0_34 = arith.constant 0 : index
    %57 = vector.load %arg11[%c0_33, %c12, %c0_34] : memref<1x36x256xf32, #tpu.memory_space<vmem>>, vector<1x12x256xf32>
    %58 = vector.shape_cast %57 : vector<1x12x256xf32> to vector<12x256xf32>
    %59 = vector.shape_cast %56 : vector<12x256xf32> to vector<1x12x256xf32>
    tpu.vector_store %arg11[%c0_33, %c12, %c0_34], %59 {strides = array<i32>} : memref<1x36x256xf32, #tpu.memory_space<vmem>>, vector<1x12x256xf32>,
    %60 = vector.extract_strided_slice %27 {offsets = [24, 0], sizes = [4, 256], strides = [1, 1]} : vector<36x256xf32> to vector<4x256xf32>
    %cst_35 = arith.constant dense<0xFF800000> : vector<256xf32>
    %61 = vector.multi_reduction <maximumf>, %60, %cst_35 [0] : vector<4x256xf32> to vector<256xf32>
    %62 = vector.shape_cast %61 : vector<256xf32> to vector<1x256xf32>
    %63 = vector.broadcast %62 : vector<1x256xf32> to vector<4x256xf32>
    %64 = arith.subf %60, %63 : vector<4x256xf32>
    %65 = math.exp %64 : vector<4x256xf32>
    %cst_36 = arith.constant dense<0.000000e+00> : vector<256xf32>
    %66 = vector.multi_reduction <add>, %65, %cst_36 [0] : vector<4x256xf32> to vector<256xf32>
    %67 = vector.shape_cast %66 : vector<256xf32> to vector<1x256xf32>
    %68 = tpu.reciprocal %67 : vector<1x256xf32> -> vector<1x256xf32>
    %69 = vector.broadcast %68 : vector<1x256xf32> to vector<4x256xf32>
    %70 = arith.mulf %65, %69 : vector<4x256xf32>
    %c0_37 = arith.constant 0 : index
    %c24 = arith.constant 24 : index
    %c0_38 = arith.constant 0 : index
    %71 = vector.load %arg11[%c0_37, %c24, %c0_38] : memref<1x36x256xf32, #tpu.memory_space<vmem>>, vector<1x4x256xf32>
    %72 = vector.shape_cast %71 : vector<1x4x256xf32> to vector<4x256xf32>
    %73 = vector.shape_cast %70 : vector<4x256xf32> to vector<1x4x256xf32>
    tpu.vector_store %arg11[%c0_37, %c24, %c0_38], %73 {strides = array<i32>} : memref<1x36x256xf32, #tpu.memory_space<vmem>>, vector<1x4x256xf32>,
    %74 = vector.extract_strided_slice %27 {offsets = [28, 0], sizes = [4, 256], strides = [1, 1]} : vector<36x256xf32> to vector<4x256xf32>
    %cst_39 = arith.constant dense<0xFF800000> : vector<256xf32>
    %75 = vector.multi_reduction <maximumf>, %74, %cst_39 [0] : vector<4x256xf32> to vector<256xf32>
    %76 = vector.shape_cast %75 : vector<256xf32> to vector<1x256xf32>
    %77 = vector.broadcast %76 : vector<1x256xf32> to vector<4x256xf32>
    %78 = arith.subf %74, %77 : vector<4x256xf32>
    %79 = math.exp %78 : vector<4x256xf32>
    %cst_40 = arith.constant dense<0.000000e+00> : vector<256xf32>
    %80 = vector.multi_reduction <add>, %79, %cst_40 [0] : vector<4x256xf32> to vector<256xf32>
    %81 = vector.shape_cast %80 : vector<256xf32> to vector<1x256xf32>
    %82 = tpu.reciprocal %81 : vector<1x256xf32> -> vector<1x256xf32>
    %83 = vector.broadcast %82 : vector<1x256xf32> to vector<4x256xf32>
    %84 = arith.mulf %79, %83 : vector<4x256xf32>
    %c0_41 = arith.constant 0 : index
    %c28 = arith.constant 28 : index
    %c0_42 = arith.constant 0 : index
    %85 = vector.load %arg11[%c0_41, %c28, %c0_42] : memref<1x36x256xf32, #tpu.memory_space<vmem>>, vector<1x4x256xf32>
    %86 = vector.shape_cast %85 : vector<1x4x256xf32> to vector<4x256xf32>
    %87 = vector.shape_cast %84 : vector<4x256xf32> to vector<1x4x256xf32>
    tpu.vector_store %arg11[%c0_41, %c28, %c0_42], %87 {strides = array<i32>} : memref<1x36x256xf32, #tpu.memory_space<vmem>>, vector<1x4x256xf32>,
    %88 = vector.extract_strided_slice %27 {offsets = [32, 0], sizes = [4, 256], strides = [1, 1]} : vector<36x256xf32> to vector<4x256xf32>
    %cst_43 = arith.constant dense<0xFF800000> : vector<256xf32>
    %89 = vector.multi_reduction <maximumf>, %88, %cst_43 [0] : vector<4x256xf32> to vector<256xf32>
    %90 = vector.shape_cast %89 : vector<256xf32> to vector<1x256xf32>
    %91 = vector.broadcast %90 : vector<1x256xf32> to vector<4x256xf32>
    %92 = arith.subf %88, %91 : vector<4x256xf32>
    %93 = math.exp %92 : vector<4x256xf32>
    %cst_44 = arith.constant dense<0.000000e+00> : vector<256xf32>
    %94 = vector.multi_reduction <add>, %93, %cst_44 [0] : vector<4x256xf32> to vector<256xf32>
    %95 = vector.shape_cast %94 : vector<256xf32> to vector<1x256xf32>
    %96 = tpu.reciprocal %95 : vector<1x256xf32> -> vector<1x256xf32>
    %97 = vector.broadcast %96 : vector<1x256xf32> to vector<4x256xf32>
    %98 = arith.mulf %93, %97 : vector<4x256xf32>
    %c0_45 = arith.constant 0 : index
    %c32 = arith.constant 32 : index
    %c0_46 = arith.constant 0 : index
    %99 = vector.load %arg11[%c0_45, %c32, %c0_46] : memref<1x36x256xf32, #tpu.memory_space<vmem>>, vector<1x4x256xf32>
    %100 = vector.shape_cast %99 : vector<1x4x256xf32> to vector<4x256xf32>
    %101 = vector.shape_cast %98 : vector<4x256xf32> to vector<1x4x256xf32>
    tpu.vector_store %arg11[%c0_45, %c32, %c0_46], %101 {strides = array<i32>} : memref<1x36x256xf32, #tpu.memory_space<vmem>>, vector<1x4x256xf32>,
    return
  }
  func.func @transform_0(%arg0: i32, %arg1: i32) -> (i32, i32, i32) {
    %c0_i32 = arith.constant 0 : i32
    %c0_i32_0 = arith.constant 0 : i32
    return %arg0, %c0_i32, %arg1 : i32, i32, i32
  }
  func.func @transform_1(%arg0: i32, %arg1: i32) -> (i32, i32) {
    %c0_i32 = arith.constant 0 : i32
    %c0_i32_0 = arith.constant 0 : i32
    %c0_i32_1 = arith.constant 0 : i32
    return %c0_i32, %c0_i32_0 : i32, i32
  }
  func.func @transform_2(%arg0: i32, %arg1: i32) -> (i32, i32) {
    %c0_i32 = arith.constant 0 : i32
    %c0_i32_0 = arith.constant 0 : i32
    %c0_i32_1 = arith.constant 0 : i32
    return %c0_i32, %c0_i32_0 : i32, i32
  }
  func.func @transform_3(%arg0: i32, %arg1: i32) -> (i32, i32) {
    %c0_i32 = arith.constant 0 : i32
    %c0_i32_0 = arith.constant 0 : i32
    %c0_i32_1 = arith.constant 0 : i32
    return %c0_i32, %c0_i32_0 : i32, i32
  }
  func.func @transform_4(%arg0: i32, %arg1: i32) -> (i32, i32) {
    %c0_i32 = arith.constant 0 : i32
    %c0_i32_0 = arith.constant 0 : i32
    %c0_i32_1 = arith.constant 0 : i32
    return %c0_i32, %c0_i32_0 : i32, i32
  }
  func.func @transform_5(%arg0: i32, %arg1: i32) -> (i32, i32) {
    %c0_i32 = arith.constant 0 : i32
    %c0_i32_0 = arith.constant 0 : i32
    %c0_i32_1 = arith.constant 0 : i32
    return %c0_i32, %c0_i32_0 : i32, i32
  }
  func.func @transform_6(%arg0: i32, %arg1: i32) -> (i32, i32) {
    %c0_i32 = arith.constant 0 : i32
    %c0_i32_0 = arith.constant 0 : i32
    %c0_i32_1 = arith.constant 0 : i32
    return %c0_i32, %c0_i32_0 : i32, i32
  }
  func.func @transform_7(%arg0: i32, %arg1: i32) -> (i32, i32) {
    %c0_i32 = arith.constant 0 : i32
    %c0_i32_0 = arith.constant 0 : i32
    %c0_i32_1 = arith.constant 0 : i32
    return %c0_i32, %c0_i32_0 : i32, i32
  }
  func.func @transform_8(%arg0: i32, %arg1: i32) -> (i32, i32) {
    %c0_i32 = arith.constant 0 : i32
    %c0_i32_0 = arith.constant 0 : i32
    %c0_i32_1 = arith.constant 0 : i32
    return %c0_i32, %c0_i32_0 : i32, i32
  }
  func.func @transform_9(%arg0: i32, %arg1: i32) -> (i32, i32, i32) {
    %c0_i32 = arith.constant 0 : i32
    %c0_i32_0 = arith.constant 0 : i32
    return %arg0, %c0_i32, %arg1 : i32, i32, i32
  }
}

</mosaic_0001>

<llo_original>
// kernel: tpu_custom_call.1
$region0: #{tpu_custom_call.1}
  #allocation0 [shape = 'u32[]', space=smem, size = 0x4, offset = 0x4, fixed_abs, tag = 'smem constant byte address 0x4 - core index']
  #allocation1 [shape = 'u32[144,128]{1,0:T(1,128)}', space=vmem, size = 0x12000, scoped, tag = 'internal scratch']
  %s0 = inlined_call_operand.vmem [shape: f32[2,5,256], index: 0, kind: input, shape index: {}]
  %s1 = inlined_call_operand.vmem [shape: f32[32,5], index: 1, kind: input, shape index: {}]
  %s2 = inlined_call_operand.vmem [shape: f32[32,1], index: 2, kind: input, shape index: {}]
  %s3 = inlined_call_operand.vmem [shape: f32[32,32], index: 3, kind: input, shape index: {}]
  %s4 = inlined_call_operand.vmem [shape: f32[32,1], index: 4, kind: input, shape index: {}]
  %s5 = inlined_call_operand.vmem [shape: f32[32,32], index: 5, kind: input, shape index: {}]
  %s6 = inlined_call_operand.vmem [shape: f32[32,1], index: 6, kind: input, shape index: {}]
  %s7 = inlined_call_operand.vmem [shape: f32[36,32], index: 7, kind: input, shape index: {}]
  %s8 = inlined_call_operand.vmem [shape: f32[36,1], index: 8, kind: input, shape index: {}]
  %s9 = inlined_call_operand.vmem [shape: f32[2,36,256], index: 9, kind: output, shape index: {}]
  %s10 = sld [smem:[#allocation0]]
  $region69: #{tpu_custom_call.1} parent=0
    _
  %s12 = ssub.s32 1, %s10
  %s13 = scalar_select 0, %s12, %s10
  loop: start=0, step=1, limit=4
  $region2: #{tpu_custom_call.1} parent=0 // loop_pre_header
    _
  $region3: #{tpu_custom_call.1} parent=0 // loop_header
    %s15 = sphi 0, %s19
    %p16 = scmp.ge.s32.totalorder %s15, 4
    %s22 = sphi 0, %s34
    %s23 = sphi 0, %s30
    %s24 = sphi 0, %s22
    %s25 = sphi 0, %s23
    %s26 = sphi 0, %s24
    %s27 = sphi 0, %s25
    %s39 = sphi 0, %s41
    %s42 = sphi 0, %s39
    %s43 = sphi 0, %s42
    %s59 = sphi 0, %s43
    %s63 = sphi 0, %s63
    %s65 = sphi 0, %s63
    %s66 = sphi 0, %s65
    %s80 = sphi 0, %s66
    %s84 = sphi 0, %s84
    %s86 = sphi 0, %s84
    %s87 = sphi 0, %s86
    %s101 = sphi 0, %s87
    %s105 = sphi 0, %s105
    %s107 = sphi 0, %s105
    %s108 = sphi 0, %s107
    %s122 = sphi 0, %s108
    %s126 = sphi 0, %s126
    %s128 = sphi 0, %s126
    %s129 = sphi 0, %s128
    %s143 = sphi 0, %s129
    %s147 = sphi 0, %s147
    %s149 = sphi 0, %s147
    %s150 = sphi 0, %s149
    %s164 = sphi 0, %s150
    %s168 = sphi 0, %s168
    %s170 = sphi 0, %s168
    %s171 = sphi 0, %s170
    %s185 = sphi 0, %s171
    %s189 = sphi 0, %s189
    %s191 = sphi 0, %s189
    %s192 = sphi 0, %s191
    %s206 = sphi 0, %s192
    %s210 = sphi 0, %s210
    %s212 = sphi 0, %s210
    %s213 = sphi 0, %s212
    %s227 = sphi 0, %s213
    %s235 = sphi 0, %s237
    %s238 = sphi 0, %s235
    %s239 = sphi 0, %s238
    %s255 = sphi 0, %s239
  $region4: #{tpu_custom_call.1} parent=0 // loop_header_branch
    %18 = sbr.rel (%p16) target = $region8
  $region5: #{tpu_custom_call.1} parent=0 // loop_body
    %s20 = ssub.s32 %s15, 1
    %s21 = ssub.s32 %s15, 2
    %s28 = sadd.s32 1, %s23
    %p29 = scmp.ge.s32.totalorder %s28, 1
    %s30 = scalar_select %p29, 0, %s28
    %s31 = sadd.s32 1, %s22
    %s32 = scalar_select %p29, %s31, %s22
    %p33 = scmp.ge.s32.totalorder %s32, 2
    %s34 = scalar_select %p33, 0, %s32
    %s35 = ssub.s32 %s22, %s34
    %s36 = ssub.s32 %s23, %s30
    %s37 = sor.u32 %s35, %s36
    %p38 = scmp.eq.s32.totalorder %s37, 0
    %s40 = sadd.s32 %s39, 1
    %s41 = scalar_select %p38, %s39, %s40
    %p44 = pneg %p38
    %p45 = scmp.eq.s32.totalorder %s15, 1
    %p46 = por %p44, %p45
    %p47 = scmp.ne.s32.totalorder %s39, %s42
    %p48 = scmp.eq.s32.totalorder %s15, 0
    %p49 = por %p47, %p48
    %p50 = scmp.ne.s32.totalorder %s39, %s42
    %p51 = scmp.eq.s32.totalorder %s20, 1
    %p52 = por %p50, %p51
    %p53 = scmp.ne.s32.totalorder %s42, %s43
    %p54 = scmp.eq.s32.totalorder %s20, 0
    %p55 = por %p53, %p54
    %p56 = scmp.ne.s32.totalorder %s42, %s43
    %p57 = scmp.eq.s32.totalorder %s21, 1
    %p58 = por %p56, %p57
    %p60 = scmp.ne.s32.totalorder %s43, %s59
    %p61 = scmp.eq.s32.totalorder %s21, 0
    %p62 = por %p60, %p61
    %s64 = sadd.s32 %s63, 1
    %p67 = scmp.eq.s32.totalorder %s15, 1
    %p68 = scmp.ne.s32.totalorder %s63, %s65
    %p69 = scmp.eq.s32.totalorder %s15, 0
    %p70 = por %p68, %p69
    %p71 = scmp.ne.s32.totalorder %s63, %s65
    %p72 = scmp.eq.s32.totalorder %s20, 1
    %p73 = por %p71, %p72
    %p74 = scmp.ne.s32.totalorder %s65, %s66
    %p75 = scmp.eq.s32.totalorder %s20, 0
    %p76 = por %p74, %p75
    %p77 = scmp.ne.s32.totalorder %s65, %s66
    %p78 = scmp.eq.s32.totalorder %s21, 1
    %p79 = por %p77, %p78
    %p81 = scmp.ne.s32.totalorder %s66, %s80
    %p82 = scmp.eq.s32.totalorder %s21, 0
    %p83 = por %p81, %p82
    %s85 = sadd.s32 %s84, 1
    %p88 = scmp.eq.s32.totalorder %s15, 1
    %p89 = scmp.ne.s32.totalorder %s84, %s86
    %p90 = scmp.eq.s32.totalorder %s15, 0
    %p91 = por %p89, %p90
    %p92 = scmp.ne.s32.totalorder %s84, %s86
    %p93 = scmp.eq.s32.totalorder %s20, 1
    %p94 = por %p92, %p93
    %p95 = scmp.ne.s32.totalorder %s86, %s87
    %p96 = scmp.eq.s32.totalorder %s20, 0
    %p97 = por %p95, %p96
    %p98 = scmp.ne.s32.totalorder %s86, %s87
    %p99 = scmp.eq.s32.totalorder %s21, 1
    %p100 = por %p98, %p99
    %p102 = scmp.ne.s32.totalorder %s87, %s101
    %p103 = scmp.eq.s32.totalorder %s21, 0
    %p104 = por %p102, %p103
    %s106 = sadd.s32 %s105, 1
    %p109 = scmp.eq.s32.totalorder %s15, 1
    %p110 = scmp.ne.s32.totalorder %s105, %s107
    %p111 = scmp.eq.s32.totalorder %s15, 0
    %p112 = por %p110, %p111
    %p113 = scmp.ne.s32.totalorder %s105, %s107
    %p114 = scmp.eq.s32.totalorder %s20, 1
    %p115 = por %p113, %p114
    %p116 = scmp.ne.s32.totalorder %s107, %s108
    %p117 = scmp.eq.s32.totalorder %s20, 0
    %p118 = por %p116, %p117
    %p119 = scmp.ne.s32.totalorder %s107, %s108
    %p120 = scmp.eq.s32.totalorder %s21, 1
    %p121 = por %p119, %p120
    %p123 = scmp.ne.s32.totalorder %s108, %s122
    %p124 = scmp.eq.s32.totalorder %s21, 0
    %p125 = por %p123, %p124
    %s127 = sadd.s32 %s126, 1
    %p130 = scmp.eq.s32.totalorder %s15, 1
    %p131 = scmp.ne.s32.totalorder %s126, %s128
    %p132 = scmp.eq.s32.totalorder %s15, 0
    %p133 = por %p131, %p132
    %p134 = scmp.ne.s32.totalorder %s126, %s128
    %p135 = scmp.eq.s32.totalorder %s20, 1
    %p136 = por %p134, %p135
    %p137 = scmp.ne.s32.totalorder %s128, %s129
    %p138 = scmp.eq.s32.totalorder %s20, 0
    %p139 = por %p137, %p138
    %p140 = scmp.ne.s32.totalorder %s128, %s129
    %p141 = scmp.eq.s32.totalorder %s21, 1
    %p142 = por %p140, %p141
    %p144 = scmp.ne.s32.totalorder %s129, %s143
    %p145 = scmp.eq.s32.totalorder %s21, 0
    %p146 = por %p144, %p145
    %s148 = sadd.s32 %s147, 1
    %p151 = scmp.eq.s32.totalorder %s15, 1
    %p152 = scmp.ne.s32.totalorder %s147, %s149
    %p153 = scmp.eq.s32.totalorder %s15, 0
    %p154 = por %p152, %p153
    %p155 = scmp.ne.s32.totalorder %s147, %s149
    %p156 = scmp.eq.s32.totalorder %s20, 1
    %p157 = por %p155, %p156
    %p158 = scmp.ne.s32.totalorder %s149, %s150
    %p159 = scmp.eq.s32.totalorder %s20, 0
    %p160 = por %p158, %p159
    %p161 = scmp.ne.s32.totalorder %s149, %s150
    %p162 = scmp.eq.s32.totalorder %s21, 1
    %p163 = por %p161, %p162
    %p165 = scmp.ne.s32.totalorder %s150, %s164
    %p166 = scmp.eq.s32.totalorder %s21, 0
    %p167 = por %p165, %p166
    %s169 = sadd.s32 %s168, 1
    %p172 = scmp.eq.s32.totalorder %s15, 1
    %p173 = scmp.ne.s32.totalorder %s168, %s170
    %p174 = scmp.eq.s32.totalorder %s15, 0
    %p175 = por %p173, %p174
    %p176 = scmp.ne.s32.totalorder %s168, %s170
    %p177 = scmp.eq.s32.totalorder %s20, 1
    %p178 = por %p176, %p177
    %p179 = scmp.ne.s32.totalorder %s170, %s171
    %p180 = scmp.eq.s32.totalorder %s20, 0
    %p181 = por %p179, %p180
    %p182 = scmp.ne.s32.totalorder %s170, %s171
    %p183 = scmp.eq.s32.totalorder %s21, 1
    %p184 = por %p182, %p183
    %p186 = scmp.ne.s32.totalorder %s171, %s185
    %p187 = scmp.eq.s32.totalorder %s21, 0
    %p188 = por %p186, %p187
    %s190 = sadd.s32 %s189, 1
    %p193 = scmp.eq.s32.totalorder %s15, 1
    %p194 = scmp.ne.s32.totalorder %s189, %s191
    %p195 = scmp.eq.s32.totalorder %s15, 0
    %p196 = por %p194, %p195
    %p197 = scmp.ne.s32.totalorder %s189, %s191
    %p198 = scmp.eq.s32.totalorder %s20, 1
    %p199 = por %p197, %p198
    %p200 = scmp.ne.s32.totalorder %s191, %s192
    %p201 = scmp.eq.s32.totalorder %s20, 0
    %p202 = por %p200, %p201
    %p203 = scmp.ne.s32.totalorder %s191, %s192
    %p204 = scmp.eq.s32.totalorder %s21, 1
    %p205 = por %p203, %p204
    %p207 = scmp.ne.s32.totalorder %s192, %s206
    %p208 = scmp.eq.s32.totalorder %s21, 0
    %p209 = por %p207, %p208
    %s211 = sadd.s32 %s210, 1
    %p214 = scmp.eq.s32.totalorder %s15, 1
    %p215 = scmp.ne.s32.totalorder %s210, %s212
    %p216 = scmp.eq.s32.totalorder %s15, 0
    %p217 = por %p215, %p216
    %p218 = scmp.ne.s32.totalorder %s210, %s212
    %p219 = scmp.eq.s32.totalorder %s20, 1
    %p220 = por %p218, %p219
    %p221 = scmp.ne.s32.totalorder %s212, %s213
    %p222 = scmp.eq.s32.totalorder %s20, 0
    %p223 = por %p221, %p222
    %p224 = scmp.ne.s32.totalorder %s212, %s213
    %p225 = scmp.eq.s32.totalorder %s21, 1
    %p226 = por %p224, %p225
    %p228 = scmp.ne.s32.totalorder %s213, %s227
    %p229 = scmp.eq.s32.totalorder %s21, 0
    %p230 = por %p228, %p229
    %s231 = ssub.s32 %s22, %s34
    %s232 = ssub.s32 %s23, %s30
    %s233 = sor.u32 %s231, %s232
    %p234 = scmp.eq.s32.totalorder %s233, 0
    %s236 = sadd.s32 %s235, 1
    %s237 = scalar_select %p234, %s235, %s236
    %p240 = pneg %p234
    %p241 = scmp.eq.s32.totalorder %s15, 1
    %p242 = por %p240, %p241
    %p243 = scmp.ne.s32.totalorder %s235, %s238
    %p244 = scmp.eq.s32.totalorder %s15, 0
    %p245 = por %p243, %p244
    %p246 = scmp.ne.s32.totalorder %s235, %s238
    %p247 = scmp.eq.s32.totalorder %s20, 1
    %p248 = por %p246, %p247
    %p249 = scmp.ne.s32.totalorder %s238, %s239
    %p250 = scmp.eq.s32.totalorder %s20, 0
    %p251 = por %p249, %p250
    %p252 = scmp.ne.s32.totalorder %s238, %s239
    %p253 = scmp.eq.s32.totalorder %s21, 1
    %p254 = por %p252, %p253
    %p256 = scmp.ne.s32.totalorder %s239, %s255
    %p257 = scmp.eq.s32.totalorder %s21, 0
    %p258 = por %p256, %p257
    %p259 = scmp.le.s32.totalorder 1, %s15
    %p260 = scmp.lt.s32.totalorder %s15, 3
    %p261 = pnand %p259, %p260
    %p262 = pneg %p261
    // Predicated region
    $region9: #{tpu_custom_call.1} parent=5 // pred_check
      _
    $region10: #{tpu_custom_call.1} parent=5 // pred_check_branch
      %264 = sbr.rel (%p261) target = $region12
    $region11: #{tpu_custom_call.1} parent=5 // pred_region
      %s265 = ssub.s32 %s15, 1
      // Predicated region
      $region13: #{tpu_custom_call.1} parent=11 // pred_check
        %p266 = pneg %p76
      $region14: #{tpu_custom_call.1} parent=11 // pred_check_branch
        %268 = sbr.rel (%p266) target = $region16
      $region15: #{tpu_custom_call.1} parent=11 // pred_region
        _
      $region16: #{tpu_custom_call.1} parent=11 // pred_fallthru
        _
      // Predicated region
      $region17: #{tpu_custom_call.1} parent=11 // pred_check
        %p269 = pneg %p97
      $region18: #{tpu_custom_call.1} parent=11 // pred_check_branch
        %271 = sbr.rel (%p269) target = $region20
      $region19: #{tpu_custom_call.1} parent=11 // pred_region
        _
      $region20: #{tpu_custom_call.1} parent=11 // pred_fallthru
        _
      // Predicated region
      $region21: #{tpu_custom_call.1} parent=11 // pred_check
        %p272 = pneg %p118
      $region22: #{tpu_custom_call.1} parent=11 // pred_check_branch
        %274 = sbr.rel (%p272) target = $region24
      $region23: #{tpu_custom_call.1} parent=11 // pred_region
        _
      $region24: #{tpu_custom_call.1} parent=11 // pred_fallthru
        _
      // Predicated region
      $region25: #{tpu_custom_call.1} parent=11 // pred_check
        %p275 = pneg %p139
      $region26: #{tpu_custom_call.1} parent=11 // pred_check_branch
        %277 = sbr.rel (%p275) target = $region28
      $region27: #{tpu_custom_call.1} parent=11 // pred_region
        _
      $region28: #{tpu_custom_call.1} parent=11 // pred_fallthru
        _
      // Predicated region
      $region29: #{tpu_custom_call.1} parent=11 // pred_check
        %p278 = pneg %p160
      $region30: #{tpu_custom_call.1} parent=11 // pred_check_branch
        %280 = sbr.rel (%p278) target = $region32
      $region31: #{tpu_custom_call.1} parent=11 // pred_region
        _
      $region32: #{tpu_custom_call.1} parent=11 // pred_fallthru
        _
      // Predicated region
      $region33: #{tpu_custom_call.1} parent=11 // pred_check
        %p281 = pneg %p181
      $region34: #{tpu_custom_call.1} parent=11 // pred_check_branch
        %283 = sbr.rel (%p281) target = $region36
      $region35: #{tpu_custom_call.1} parent=11 // pred_region
        _
      $region36: #{tpu_custom_call.1} parent=11 // pred_fallthru
        _
      // Predicated region
      $region37: #{tpu_custom_call.1} parent=11 // pred_check
        %p284 = pneg %p202
      $region38: #{tpu_custom_call.1} parent=11 // pred_check_branch
        %286 = sbr.rel (%p284) target = $region40
      $region39: #{tpu_custom_call.1} parent=11 // pred_region
        _
      $region40: #{tpu_custom_call.1} parent=11 // pred_fallthru
        _
      // Predicated region
      $region41: #{tpu_custom_call.1} parent=11 // pred_check
        %p287 = pneg %p223
      $region42: #{tpu_custom_call.1} parent=11 // pred_check_branch
        %289 = sbr.rel (%p287) target = $region44
      $region43: #{tpu_custom_call.1} parent=11 // pred_region
        _
      $region44: #{tpu_custom_call.1} parent=11 // pred_fallthru
        _
    $region12: #{tpu_custom_call.1} parent=5 // pred_fallthru
      _
    %p290 = scmp.lt.s32.totalorder %s15, 2
    // Predicated region
    $region45: #{tpu_custom_call.1} parent=5 // pred_check
      %p291 = pneg %p290
    $region46: #{tpu_custom_call.1} parent=5 // pred_check_branch
      %293 = sbr.rel (%p291) target = $region48
    $region47: #{tpu_custom_call.1} parent=5 // pred_region
      // Predicated region
      $region49: #{tpu_custom_call.1} parent=47 // pred_check
        %p294 = pneg %p49
      $region50: #{tpu_custom_call.1} parent=47 // pred_check_branch
        %296 = sbr.rel (%p294) target = $region52
      $region51: #{tpu_custom_call.1} parent=47 // pred_region
        %s297 = smul.u32 2, %s23
        %p298 = scmp.lt.s32.totalorder %s22, 1
        %s299 = scalar_select %p298, %s22, 1
        %p300 = scmp.lt.s32.totalorder %s297, 1
        %s301 = scalar_select %p300, %s297, 1
        %s302 = smul.addr %s299, 2
        %s303 = sadd.s32 %s301, %s302
        %s304 = smul.addr %s303, 8
        %s305 = scalar_lea.vmem %s0, %s304
        %s306 = smul.u32 2, %s23
      $region52: #{tpu_custom_call.1} parent=47 // pred_fallthru
        _
    $region48: #{tpu_custom_call.1} parent=5 // pred_fallthru
      _
    %p307 = scmp.le.s32.totalorder 1, %s15
    %p308 = scmp.lt.s32.totalorder %s15, 3
    %p309 = pnand %p307, %p308
    %p310 = pneg %p309
    // Predicated region
    $region53: #{tpu_custom_call.1} parent=5 // pred_check
      _
    $region54: #{tpu_custom_call.1} parent=5 // pred_check_branch
      %312 = sbr.rel (%p309) target = $region56
    $region55: #{tpu_custom_call.1} parent=5 // pred_region
      %s313 = ssub.s32 %s15, 1
      %s314 = smul.u32 2, %s25
      %p315 = scmp.lt.s32.totalorder %s24, 1
      %s316 = scalar_select %p315, %s24, 1
      %p317 = scmp.lt.s32.totalorder %s314, 1
      %s318 = scalar_select %p317, %s314, 1
      %s319 = smul.addr %s316, 2
      %s320 = sadd.s32 %s318, %s319
      %s321 = smul.addr %s320, 8
      %s322 = scalar_lea.vmem %s0, %s321
      %p323 = pneg %p55
      %p324 = pneg %p52
      %p325 = pneg %p76
      %p326 = pneg %p73
      %p327 = pneg %p97
      %p328 = pneg %p94
      %p329 = pneg %p118
      %p330 = pneg %p115
      %p331 = pneg %p139
      %p332 = pneg %p136
      %p333 = pneg %p160
      %p334 = pneg %p157
      %p335 = pneg %p181
      %p336 = pneg %p178
      %p337 = pneg %p202
      %p338 = pneg %p199
      %p339 = pneg %p223
      %p340 = pneg %p220
      %p341 = pneg %p251
      %p342 = pneg %p248
      %s343 = smul.u32 2, %s25
      %p344 = scmp.lt.s32.totalorder %s24, 1
      %s345 = scalar_select %p344, %s24, 1
      %p346 = scmp.lt.s32.totalorder %s343, 1
      %s347 = scalar_select %p346, %s343, 1
      %s348 = smul.addr %s345, 10
      %s349 = sadd.s32 %s347, %s348
      %s350 = smul.addr %s349, 8
      %s351 = scalar_lea.vmem %s9, %s350
      %s352 = smul.u32 2, %s25
      %p353 = scmp.lt.s32.totalorder %s24, 1
      %s354 = scalar_select %p353, %s24, 1
      %p355 = scmp.lt.s32.totalorder %s352, 1
      %s356 = scalar_select %p355, %s352, 1
      %s357 = smul.addr %s354, 2
      %s358 = sadd.s32 %s356, %s357
      %s359 = smul.addr %s358, 8
      %s360 = scalar_lea.vmem %s0, %s359
      %s361 = smul.u32 2, %s25
      %s362 = smul.u32 2, %s25
      %p363 = scmp.lt.s32.totalorder %s24, 1
      %s364 = scalar_select %p363, %s24, 1
      %p365 = scmp.lt.s32.totalorder %s362, 1
      %s366 = scalar_select %p365, %s362, 1
      %s367 = smul.addr %s364, 10
      %s368 = sadd.s32 %s366, %s367
      %s369 = smul.addr %s368, 8
      %s370 = scalar_lea.vmem %s9, %s369
      %s371 = smul.u32 2, %s25
      %v372 = vld [vmem:[%s360] sm:$0x1f]
      %v373 = vld [vmem:[%s360 + $0x8] sm:$0x1f]
      %v374 = vld [vmem:[%s1] sm:$0xff]
      %v375 = vld [vmem:[%s1 + $0x8] sm:$0xff]
      %v376 = vld [vmem:[%s1 + $0x10] sm:$0xff]
      %v377 = vld [vmem:[%s1 + $0x18] sm:$0xff]
      %v378 = vld [vmem:[%s2] sm:$0xff]
      %v379 = vld [vmem:[%s2 + $0x8] sm:$0xff]
      %v380 = vld [vmem:[%s2 + $0x10] sm:$0xff]
      %v381 = vld [vmem:[%s2 + $0x18] sm:$0xff]
      %383 = vset.pattern.permute.xlu0 0
      %384 = vperm.xlu0 %383, %v378
      %v385 = vpop.permute.xlu0 %384
      %388 = vset.pattern.permute.xlu0 0
      %389 = vperm.xlu0 %388, %v379
      %v390 = vpop.permute.xlu0 %389
      %393 = vset.pattern.permute.xlu0 0
      %394 = vperm.xlu0 %393, %v380
      %v395 = vpop.permute.xlu0 %394
      %398 = vset.pattern.permute.xlu0 0
      %399 = vperm.xlu0 %398, %v381
      %v400 = vpop.permute.xlu0 %399
      %vm402 = vcmask 39936
      %v404 = vsel %vm402, %v374, 0
      %v407 = vsel %vm402, %v375, 0
      %v410 = vsel %vm402, %v376, 0
      %v413 = vsel %vm402, %v377, 0
      %vm415 = vcmask 1044480
      %v417 = vsel %vm415, %v372, 0
      %v420 = vsel %vm415, %v373, 0
      %422 = vmatprep.subr.mxu0 0.0
      %423 = vmatpush1.msra.mxu0 0.0
      %424 = vmatprep.subr.mxu0 0.0
      %425 = vmatpush1.msra.mxu0 0.0
      %426 = vmatprep.subr.mxu0 0.0
      %427 = vmatpush1.msra.mxu0 0.0
      %428 = vmatprep.subr.mxu0 0.0
      %429 = vmatpush1.msra.mxu0 0.0
      %430 = vmatprep.subr.mxu0 0.0
      %431 = vmatpush1.msra.mxu0 0.0
      %432 = vmatprep.subr.mxu0 0.0
      %433 = vmatpush1.msra.mxu0 0.0
      %434 = vmatprep.subr.mxu0 0.0
      %435 = vmatpush1.msra.mxu0 0.0
      %436 = vmatprep.subr.mxu0 0.0
      %437 = vmatpush1.msra.mxu0 0.0
      %438 = vmatprep.subr.mxu0 0.0
      %439 = vmatpush1.msra.mxu0 0.0
      %440 = vmatprep.subr.mxu0 0.0
      %441 = vmatpush1.msra.mxu0 0.0
      %442 = vmatprep.subr.mxu0 0.0
      %443 = vmatpush1.msra.mxu0 0.0
      %444 = vmatprep.subr.mxu0 0.0
      %445 = vmatpush1.msra.mxu0 0.0
      %446 = vmatprep.subr.mxu0 0.0
      %447 = vmatpush1.msra.mxu0 0.0
      %448 = vmatprep.subr.mxu0 0.0
      %449 = vmatpush1.msra.mxu0 0.0
      %450 = vmatprep.subr.mxu0 0.0
      %451 = vmatpush1.msra.mxu0 0.0
      %452 = vmatprep.subr.mxu0 %v420
      %453 = vmatpush1.msra.mxu0 %v417
      %454 = vmatprep.subr.mxu0 0.0
      %455 = vmatpush2.msra.mxu0 0.0
      %456 = vmatprep.subr.mxu0 0.0
      %457 = vmatpush2.msra.mxu0 0.0
      %458 = vmatprep.subr.mxu0 0.0
      %459 = vmatpush2.msra.mxu0 0.0
      %460 = vmatprep.subr.mxu0 0.0
      %461 = vmatpush2.msra.mxu0 0.0
      %462 = vmatprep.subr.mxu0 0.0
      %463 = vmatpush2.msra.mxu0 0.0
      %464 = vmatprep.subr.mxu0 0.0
      %465 = vmatpush2.msra.mxu0 0.0
      %466 = vmatprep.subr.mxu0 0.0
      %467 = vmatpush2.msra.mxu0 0.0
      %468 = vmatprep.subr.mxu0 0.0
      %469 = vmatpush2.msra.mxu0 0.0
      %470 = vmatprep.subr.mxu0 0.0
      %471 = vmatpush2.msra.mxu0 0.0
      %472 = vmatprep.subr.mxu0 0.0
      %473 = vmatpush2.msra.mxu0 0.0
      %474 = vmatprep.subr.mxu0 0.0
      %475 = vmatpush2.msra.mxu0 0.0
      %476 = vmatprep.subr.mxu0 0.0
      %477 = vmatpush2.msra.mxu0 0.0
      %478 = vmatprep.subr.mxu0 0.0
      %479 = vmatpush2.msra.mxu0 0.0
      %480 = vmatprep.subr.mxu0 0.0
      %481 = vmatpush2.msra.mxu0 0.0
      %482 = vmatprep.subr.mxu0 0.0
      %483 = vmatpush2.msra.mxu0 0.0
      %484 = vmatprep.subr.mxu0 0.0
      %485 = vmatpush2.msra.mxu0 0.0
      %486 = vmatprep.mubr.f32.mxu0 0.0
      %487 = vmatmul.mubr.f32.gmra.mxu0 %v404
      %v488 = vpop.f32.mrf.mxu0
      %v489 = vadd.f32 %v385, %v488
      %v490 = vpop.f32.mrf.mxu0
      %v491 = vadd.f32 %v385, %v490
      %492 = vmatprep.mubr.f32.mxu0 0.0
      %493 = vmatmul.mubr.f32.gmra.mxu0 %v407
      %v494 = vpop.f32.mrf.mxu0
      %v495 = vadd.f32 %v390, %v494
      %v496 = vpop.f32.mrf.mxu0
      %v497 = vadd.f32 %v390, %v496
      %498 = vmatprep.mubr.f32.mxu0 0.0
      %499 = vmatmul.mubr.f32.gmra.mxu0 %v410
      %v500 = vpop.f32.mrf.mxu0
      %v501 = vadd.f32 %v395, %v500
      %v502 = vpop.f32.mrf.mxu0
      %v503 = vadd.f32 %v395, %v502
      %504 = vmatprep.mubr.f32.mxu0 0.0
      %505 = vmatmul.mubr.f32.gmra.mxu0 %v413
      %v506 = vpop.f32.mrf.mxu0
      %v507 = vadd.f32 %v400, %v506
      %v508 = vpop.f32.mrf.mxu0
      %v509 = vadd.f32 %v400, %v508
      %510 = vdwg.mxu0
      %v511 = vmax.f32 %v489, 0.0
      %v512 = vmax.f32 %v491, 0.0
      %v513 = vmax.f32 %v495, 0.0
      %v514 = vmax.f32 %v497, 0.0
      %v515 = vmax.f32 %v501, 0.0
      %v516 = vmax.f32 %v503, 0.0
      %v517 = vmax.f32 %v507, 0.0
      %v518 = vmax.f32 %v509, 0.0
      %v519 = vld [vmem:[%s3] sm:$0xff]
      %v520 = vld [vmem:[%s3 + $0x8] sm:$0xff]
      %v521 = vld [vmem:[%s3 + $0x10] sm:$0xff]
      %v522 = vld [vmem:[%s3 + $0x18] sm:$0xff]
      %v523 = vld [vmem:[%s4] sm:$0xff]
      %v524 = vld [vmem:[%s4 + $0x8] sm:$0xff]
      %v525 = vld [vmem:[%s4 + $0x10] sm:$0xff]
      %v526 = vld [vmem:[%s4 + $0x18] sm:$0xff]
      %528 = vset.pattern.permute.xlu0 0
      %529 = vperm.xlu0 %528, %v523
      %v530 = vpop.permute.xlu0 %529
      %533 = vset.pattern.permute.xlu0 0
      %534 = vperm.xlu0 %533, %v524
      %v535 = vpop.permute.xlu0 %534
      %538 = vset.pattern.permute.xlu0 0
      %539 = vperm.xlu0 %538, %v525
      %v540 = vpop.permute.xlu0 %539
      %543 = vset.pattern.permute.xlu0 0
      %544 = vperm.xlu0 %543, %v526
      %v545 = vpop.permute.xlu0 %544
      %vm547 = vcmask 261120
      %v549 = vsel %vm547, %v519, 0
      %v552 = vsel %vm547, %v520, 0
      %v555 = vsel %vm547, %v521, 0
      %v558 = vsel %vm547, %v522, 0
      %560 = vmatprep.subr.mxu0 0.0
      %561 = vmatpush1.msra.mxu0 0.0
      %562 = vmatprep.subr.mxu0 0.0
      %563 = vmatpush1.msra.mxu0 0.0
      %564 = vmatprep.subr.mxu0 0.0
      %565 = vmatpush1.msra.mxu0 0.0
      %566 = vmatprep.subr.mxu0 0.0
      %567 = vmatpush1.msra.mxu0 0.0
      %568 = vmatprep.subr.mxu0 0.0
      %569 = vmatpush1.msra.mxu0 0.0
      %570 = vmatprep.subr.mxu0 0.0
      %571 = vmatpush1.msra.mxu0 0.0
      %572 = vmatprep.subr.mxu0 0.0
      %573 = vmatpush1.msra.mxu0 0.0
      %574 = vmatprep.subr.mxu0 0.0
      %575 = vmatpush1.msra.mxu0 0.0
      %576 = vmatprep.subr.mxu0 0.0
      %577 = vmatpush1.msra.mxu0 0.0
      %578 = vmatprep.subr.mxu0 0.0
      %579 = vmatpush1.msra.mxu0 0.0
      %580 = vmatprep.subr.mxu0 0.0
      %581 = vmatpush1.msra.mxu0 0.0
      %582 = vmatprep.subr.mxu0 0.0
      %583 = vmatpush1.msra.mxu0 0.0
      %584 = vmatprep.subr.mxu0 %v518
      %585 = vmatpush1.msra.mxu0 %v517
      %586 = vmatprep.subr.mxu0 %v516
      %587 = vmatpush1.msra.mxu0 %v515
      %588 = vmatprep.subr.mxu0 %v514
      %589 = vmatpush1.msra.mxu0 %v513
      %590 = vmatprep.subr.mxu0 %v512
      %591 = vmatpush1.msra.mxu0 %v511
      %592 = vmatprep.subr.mxu0 0.0
      %593 = vmatpush2.msra.mxu0 0.0
      %594 = vmatprep.subr.mxu0 0.0
      %595 = vmatpush2.msra.mxu0 0.0
      %596 = vmatprep.subr.mxu0 0.0
      %597 = vmatpush2.msra.mxu0 0.0
      %598 = vmatprep.subr.mxu0 0.0
      %599 = vmatpush2.msra.mxu0 0.0
      %600 = vmatprep.subr.mxu0 0.0
      %601 = vmatpush2.msra.mxu0 0.0
      %602 = vmatprep.subr.mxu0 0.0
      %603 = vmatpush2.msra.mxu0 0.0
      %604 = vmatprep.subr.mxu0 0.0
      %605 = vmatpush2.msra.mxu0 0.0
      %606 = vmatprep.subr.mxu0 0.0
      %607 = vmatpush2.msra.mxu0 0.0
      %608 = vmatprep.subr.mxu0 0.0
      %609 = vmatpush2.msra.mxu0 0.0
      %610 = vmatprep.subr.mxu0 0.0
      %611 = vmatpush2.msra.mxu0 0.0
      %612 = vmatprep.subr.mxu0 0.0
      %613 = vmatpush2.msra.mxu0 0.0
      %614 = vmatprep.subr.mxu0 0.0
      %615 = vmatpush2.msra.mxu0 0.0
      %616 = vmatprep.subr.mxu0 0.0
      %617 = vmatpush2.msra.mxu0 0.0
      %618 = vmatprep.subr.mxu0 0.0
      %619 = vmatpush2.msra.mxu0 0.0
      %620 = vmatprep.subr.mxu0 0.0
      %621 = vmatpush2.msra.mxu0 0.0
      %622 = vmatprep.subr.mxu0 0.0
      %623 = vmatpush2.msra.mxu0 0.0
      %624 = vmatprep.mubr.f32.mxu0 0.0
      %625 = vmatmul.mubr.f32.gmra.mxu0 %v549
      %v626 = vpop.f32.mrf.mxu0
      %v627 = vadd.f32 %v530, %v626
      %v628 = vpop.f32.mrf.mxu0
      %v629 = vadd.f32 %v530, %v628
      %630 = vmatprep.mubr.f32.mxu0 0.0
      %631 = vmatmul.mubr.f32.gmra.mxu0 %v552
      %v632 = vpop.f32.mrf.mxu0
      %v633 = vadd.f32 %v535, %v632
      %v634 = vpop.f32.mrf.mxu0
      %v635 = vadd.f32 %v535, %v634
      %636 = vmatprep.mubr.f32.mxu0 0.0
      %637 = vmatmul.mubr.f32.gmra.mxu0 %v555
      %v638 = vpop.f32.mrf.mxu0
      %v639 = vadd.f32 %v540, %v638
      %v640 = vpop.f32.mrf.mxu0
      %v641 = vadd.f32 %v540, %v640
      %642 = vmatprep.mubr.f32.mxu0 0.0
      %643 = vmatmul.mubr.f32.gmra.mxu0 %v558
      %v644 = vpop.f32.mrf.mxu0
      %v645 = vadd.f32 %v545, %v644
      %v646 = vpop.f32.mrf.mxu0
      %v647 = vadd.f32 %v545, %v646
      %648 = vdwg.mxu0
      %v649 = vmax.f32 %v627, 0.0
      %v650 = vmax.f32 %v629, 0.0
      %v651 = vmax.f32 %v633, 0.0
      %v652 = vmax.f32 %v635, 0.0
      %v653 = vmax.f32 %v639, 0.0
      %v654 = vmax.f32 %v641, 0.0
      %v655 = vmax.f32 %v645, 0.0
      %v656 = vmax.f32 %v647, 0.0
      %v657 = vld [vmem:[%s5] sm:$0xff]
      %v658 = vld [vmem:[%s5 + $0x8] sm:$0xff]
      %v659 = vld [vmem:[%s5 + $0x10] sm:$0xff]
      %v660 = vld [vmem:[%s5 + $0x18] sm:$0xff]
      %v661 = vld [vmem:[%s6] sm:$0xff]
      %v662 = vld [vmem:[%s6 + $0x8] sm:$0xff]
      %v663 = vld [vmem:[%s6 + $0x10] sm:$0xff]
      %v664 = vld [vmem:[%s6 + $0x18] sm:$0xff]
      %666 = vset.pattern.permute.xlu0 0
      %667 = vperm.xlu0 %666, %v661
      %v668 = vpop.permute.xlu0 %667
      %671 = vset.pattern.permute.xlu0 0
      %672 = vperm.xlu0 %671, %v662
      %v673 = vpop.permute.xlu0 %672
      %676 = vset.pattern.permute.xlu0 0
      %677 = vperm.xlu0 %676, %v663
      %v678 = vpop.permute.xlu0 %677
      %681 = vset.pattern.permute.xlu0 0
      %682 = vperm.xlu0 %681, %v664
      %v683 = vpop.permute.xlu0 %682
      %v686 = vsel %vm547, %v657, 0
      %v689 = vsel %vm547, %v658, 0
      %v692 = vsel %vm547, %v659, 0
      %v695 = vsel %vm547, %v660, 0
      %697 = vmatprep.subr.mxu0 0.0
      %698 = vmatpush1.msra.mxu0 0.0
      %699 = vmatprep.subr.mxu0 0.0
      %700 = vmatpush1.msra.mxu0 0.0
      %701 = vmatprep.subr.mxu0 0.0
      %702 = vmatpush1.msra.mxu0 0.0
      %703 = vmatprep.subr.mxu0 0.0
      %704 = vmatpush1.msra.mxu0 0.0
      %705 = vmatprep.subr.mxu0 0.0
      %706 = vmatpush1.msra.mxu0 0.0
      %707 = vmatprep.subr.mxu0 0.0
      %708 = vmatpush1.msra.mxu0 0.0
      %709 = vmatprep.subr.mxu0 0.0
      %710 = vmatpush1.msra.mxu0 0.0
      %711 = vmatprep.subr.mxu0 0.0
      %712 = vmatpush1.msra.mxu0 0.0
      %713 = vmatprep.subr.mxu0 0.0
      %714 = vmatpush1.msra.mxu0 0.0
      %715 = vmatprep.subr.mxu0 0.0
      %716 = vmatpush1.msra.mxu0 0.0
      %717 = vmatprep.subr.mxu0 0.0
      %718 = vmatpush1.msra.mxu0 0.0
      %719 = vmatprep.subr.mxu0 0.0
      %720 = vmatpush1.msra.mxu0 0.0
      %721 = vmatprep.subr.mxu0 %v656
      %722 = vmatpush1.msra.mxu0 %v655
      %723 = vmatprep.subr.mxu0 %v654
      %724 = vmatpush1.msra.mxu0 %v653
      %725 = vmatprep.subr.mxu0 %v652
      %726 = vmatpush1.msra.mxu0 %v651
      %727 = vmatprep.subr.mxu0 %v650
      %728 = vmatpush1.msra.mxu0 %v649
      %729 = vmatprep.subr.mxu0 0.0
      %730 = vmatpush2.msra.mxu0 0.0
      %731 = vmatprep.subr.mxu0 0.0
      %732 = vmatpush2.msra.mxu0 0.0
      %733 = vmatprep.subr.mxu0 0.0
      %734 = vmatpush2.msra.mxu0 0.0
      %735 = vmatprep.subr.mxu0 0.0
      %736 = vmatpush2.msra.mxu0 0.0
      %737 = vmatprep.subr.mxu0 0.0
      %738 = vmatpush2.msra.mxu0 0.0
      %739 = vmatprep.subr.mxu0 0.0
      %740 = vmatpush2.msra.mxu0 0.0
      %741 = vmatprep.subr.mxu0 0.0
      %742 = vmatpush2.msra.mxu0 0.0
      %743 = vmatprep.subr.mxu0 0.0
      %744 = vmatpush2.msra.mxu0 0.0
      %745 = vmatprep.subr.mxu0 0.0
      %746 = vmatpush2.msra.mxu0 0.0
      %747 = vmatprep.subr.mxu0 0.0
      %748 = vmatpush2.msra.mxu0 0.0
      %749 = vmatprep.subr.mxu0 0.0
      %750 = vmatpush2.msra.mxu0 0.0
      %751 = vmatprep.subr.mxu0 0.0
      %752 = vmatpush2.msra.mxu0 0.0
      %753 = vmatprep.subr.mxu0 0.0
      %754 = vmatpush2.msra.mxu0 0.0
      %755 = vmatprep.subr.mxu0 0.0
      %756 = vmatpush2.msra.mxu0 0.0
      %757 = vmatprep.subr.mxu0 0.0
      %758 = vmatpush2.msra.mxu0 0.0
      %759 = vmatprep.subr.mxu0 0.0
      %760 = vmatpush2.msra.mxu0 0.0
      %761 = vmatprep.mubr.f32.mxu0 0.0
      %762 = vmatmul.mubr.f32.gmra.mxu0 %v686
      %v763 = vpop.f32.mrf.mxu0
      %v764 = vadd.f32 %v668, %v763
      %v765 = vpop.f32.mrf.mxu0
      %v766 = vadd.f32 %v668, %v765
      %767 = vmatprep.mubr.f32.mxu0 0.0
      %768 = vmatmul.mubr.f32.gmra.mxu0 %v689
      %v769 = vpop.f32.mrf.mxu0
      %v770 = vadd.f32 %v673, %v769
      %v771 = vpop.f32.mrf.mxu0
      %v772 = vadd.f32 %v673, %v771
      %773 = vmatprep.mubr.f32.mxu0 0.0
      %774 = vmatmul.mubr.f32.gmra.mxu0 %v692
      %v775 = vpop.f32.mrf.mxu0
      %v776 = vadd.f32 %v678, %v775
      %v777 = vpop.f32.mrf.mxu0
      %v778 = vadd.f32 %v678, %v777
      %779 = vmatprep.mubr.f32.mxu0 0.0
      %780 = vmatmul.mubr.f32.gmra.mxu0 %v695
      %v781 = vpop.f32.mrf.mxu0
      %v782 = vadd.f32 %v683, %v781
      %v783 = vpop.f32.mrf.mxu0
      %v784 = vadd.f32 %v683, %v783
      %785 = vdwg.mxu0
      %v786 = vmax.f32 %v764, 0.0
      %v787 = vmax.f32 %v766, 0.0
      %v788 = vmax.f32 %v770, 0.0
      %v789 = vmax.f32 %v772, 0.0
      %v790 = vmax.f32 %v776, 0.0
      %v791 = vmax.f32 %v778, 0.0
      %v792 = vmax.f32 %v782, 0.0
      %v793 = vmax.f32 %v784, 0.0
      %v794 = vld [vmem:[%s7] sm:$0xff]
      %v795 = vld [vmem:[%s7 + $0x8] sm:$0xff]
      %v796 = vld [vmem:[%s7 + $0x10] sm:$0xff]
      %v797 = vld [vmem:[%s7 + $0x18] sm:$0xff]
      %v798 = vld [vmem:[%s7 + $0x20] sm:$0xf]
      %v799 = vld [vmem:[%s8] sm:$0xff]
      %v800 = vld [vmem:[%s8 + $0x8] sm:$0xff]
      %v801 = vld [vmem:[%s8 + $0x10] sm:$0xff]
      %v802 = vld [vmem:[%s8 + $0x18] sm:$0xff]
      %v803 = vld [vmem:[%s8 + $0x20] sm:$0xf]
      %805 = vset.pattern.permute.xlu0 0
      %806 = vperm.xlu0 %805, %v799
      %v807 = vpop.permute.xlu0 %806
      %810 = vset.pattern.permute.xlu0 0
      %811 = vperm.xlu0 %810, %v800
      %v812 = vpop.permute.xlu0 %811
      %815 = vset.pattern.permute.xlu0 0
      %816 = vperm.xlu0 %815, %v801
      %v817 = vpop.permute.xlu0 %816
      %820 = vset.pattern.permute.xlu0 0
      %821 = vperm.xlu0 %820, %v802
      %v822 = vpop.permute.xlu0 %821
      %825 = vset.pattern.permute.xlu0 0
      %826 = vperm.xlu0 %825, %v803
      %v827 = vpop.permute.xlu0 %826
      %v830 = vsel %vm547, %v794, 0
      %v833 = vsel %vm547, %v795, 0
      %v836 = vsel %vm547, %v796, 0
      %v839 = vsel %vm547, %v797, 0
      %v842 = vsel %vm547, %v798, 0
      %844 = vmatprep.subr.mxu0 0.0
      %845 = vmatpush1.msra.mxu0 0.0
      %846 = vmatprep.subr.mxu0 0.0
      %847 = vmatpush1.msra.mxu0 0.0
      %848 = vmatprep.subr.mxu0 0.0
      %849 = vmatpush1.msra.mxu0 0.0
      %850 = vmatprep.subr.mxu0 0.0
      %851 = vmatpush1.msra.mxu0 0.0
      %852 = vmatprep.subr.mxu0 0.0
      %853 = vmatpush1.msra.mxu0 0.0
      %854 = vmatprep.subr.mxu0 0.0
      %855 = vmatpush1.msra.mxu0 0.0
      %856 = vmatprep.subr.mxu0 0.0
      %857 = vmatpush1.msra.mxu0 0.0
      %858 = vmatprep.subr.mxu0 0.0
      %859 = vmatpush1.msra.mxu0 0.0
      %860 = vmatprep.subr.mxu0 0.0
      %861 = vmatpush1.msra.mxu0 0.0
      %862 = vmatprep.subr.mxu0 0.0
      %863 = vmatpush1.msra.mxu0 0.0
      %864 = vmatprep.subr.mxu0 0.0
      %865 = vmatpush1.msra.mxu0 0.0
      %866 = vmatprep.subr.mxu0 0.0
      %867 = vmatpush1.msra.mxu0 0.0
      %868 = vmatprep.subr.mxu0 %v793
      %869 = vmatpush1.msra.mxu0 %v792
      %870 = vmatprep.subr.mxu0 %v791
      %871 = vmatpush1.msra.mxu0 %v790
      %872 = vmatprep.subr.mxu0 %v789
      %873 = vmatpush1.msra.mxu0 %v788
      %874 = vmatprep.subr.mxu0 %v787
      %875 = vmatpush1.msra.mxu0 %v786
      %876 = vmatprep.subr.mxu0 0.0
      %877 = vmatpush2.msra.mxu0 0.0
      %878 = vmatprep.subr.mxu0 0.0
      %879 = vmatpush2.msra.mxu0 0.0
      %880 = vmatprep.subr.mxu0 0.0
      %881 = vmatpush2.msra.mxu0 0.0
      %882 = vmatprep.subr.mxu0 0.0
      %883 = vmatpush2.msra.mxu0 0.0
      %884 = vmatprep.subr.mxu0 0.0
      %885 = vmatpush2.msra.mxu0 0.0
      %886 = vmatprep.subr.mxu0 0.0
      %887 = vmatpush2.msra.mxu0 0.0
      %888 = vmatprep.subr.mxu0 0.0
      %889 = vmatpush2.msra.mxu0 0.0
      %890 = vmatprep.subr.mxu0 0.0
      %891 = vmatpush2.msra.mxu0 0.0
      %892 = vmatprep.subr.mxu0 0.0
      %893 = vmatpush2.msra.mxu0 0.0
      %894 = vmatprep.subr.mxu0 0.0
      %895 = vmatpush2.msra.mxu0 0.0
      %896 = vmatprep.subr.mxu0 0.0
      %897 = vmatpush2.msra.mxu0 0.0
      %898 = vmatprep.subr.mxu0 0.0
      %899 = vmatpush2.msra.mxu0 0.0
      %900 = vmatprep.subr.mxu0 0.0
      %901 = vmatpush2.msra.mxu0 0.0
      %902 = vmatprep.subr.mxu0 0.0
      %903 = vmatpush2.msra.mxu0 0.0
      %904 = vmatprep.subr.mxu0 0.0
      %905 = vmatpush2.msra.mxu0 0.0
      %906 = vmatprep.subr.mxu0 0.0
      %907 = vmatpush2.msra.mxu0 0.0
      %908 = vmatprep.mubr.f32.mxu0 0.0
      %909 = vmatmul.mubr.f32.gmra.mxu0 %v830
      %v910 = vpop.f32.mrf.mxu0
      %v911 = vadd.f32 %v807, %v910
      %v912 = vpop.f32.mrf.mxu0
      %v913 = vadd.f32 %v807, %v912
      %914 = vmatprep.mubr.f32.mxu0 0.0
      %915 = vmatmul.mubr.f32.gmra.mxu0 %v833
      %v916 = vpop.f32.mrf.mxu0
      %v917 = vadd.f32 %v812, %v916
      %v918 = vpop.f32.mrf.mxu0
      %v919 = vadd.f32 %v812, %v918
      %920 = vmatprep.mubr.f32.mxu0 0.0
      %921 = vmatmul.mubr.f32.gmra.mxu0 %v836
      %v922 = vpop.f32.mrf.mxu0
      %v923 = vadd.f32 %v817, %v922
      %v924 = vpop.f32.mrf.mxu0
      %v925 = vadd.f32 %v817, %v924
      %926 = vmatprep.mubr.f32.mxu0 0.0
      %927 = vmatmul.mubr.f32.gmra.mxu0 %v839
      %v928 = vpop.f32.mrf.mxu0
      %v929 = vadd.f32 %v822, %v928
      %v930 = vpop.f32.mrf.mxu0
      %v931 = vadd.f32 %v822, %v930
      %932 = vmatprep.mubr.f32.mxu0 0.0
      %933 = vmatmul.mubr.f32.gmra.mxu0 %v842
      %v934 = vpop.f32.mrf.mxu0
      %v935 = vadd.f32 %v827, %v934
      %v936 = vpop.f32.mrf.mxu0
      %v937 = vadd.f32 %v827, %v936
      %938 = vdwg.mxu0
      %v939 = vlaneseq
      %v940 = vshrl.u32 %v939, 7
      %v941 = vsub.s32 0, %v940
      %v942 = vrot.slane %v372, %v941
      %v943 = vlaneseq
      %v944 = vshrl.u32 %v943, 7
      %v945 = vsub.s32 0, %v944
      %v946 = vrot.slane %v373, %v945
      %v947 = vadd.f32 %v911, %v942
      %v948 = vadd.f32 %v913, %v946
      %949 = vst [vmem:[%s370] sm:$0xf] %v947
      %950 = vst [vmem:[%s370 + $0x8] sm:$0xf] %v948
      %v951 = vlaneseq
      %v952 = vshrl.u32 %v951, 7
      %v953 = vsub.s32 1, %v952
      %v954 = vrot.slane %v372, %v953
      %v955 = vlaneseq
      %v956 = vshrl.u32 %v955, 7
      %v957 = vsub.s32 1, %v956
      %v958 = vrot.slane %v373, %v957
      %v959 = vadd.f32 %v911, %v954
      %v960 = vadd.f32 %v913, %v958
      %961 = vst [vmem:[%s370] sm:$0xf0] %v959
      %962 = vst [vmem:[%s370 + $0x8] sm:$0xf0] %v960
      %v963 = vlaneseq
      %v964 = vshrl.u32 %v963, 7
      %v965 = vsub.s32 2, %v964
      %v966 = vrot.slane %v372, %v965
      %v967 = vlaneseq
      %v968 = vshrl.u32 %v967, 7
      %v969 = vsub.s32 2, %v968
      %v970 = vrot.slane %v373, %v969
      %v971 = vadd.f32 %v917, %v966
      %v972 = vadd.f32 %v919, %v970
      %973 = vst [vmem:[%s370 + $0x10] sm:$0xf] %v971
      %974 = vst [vmem:[%s370 + $0x18] sm:$0xf] %v972
      %vm975 = vcmp.gt.f32.partialorder %v917, 20.0
      %vm976 = vcmp.gt.f32.partialorder %v919, 20.0
      %vm977 = vcmp.gt.f32.partialorder %v923, 20.0
      %vm978 = vcmp.gt.f32.partialorder %v925, 20.0
      %v979 = vmin.f32 %v917, 20.0
      %v980 = vmin.f32 %v919, 20.0
      %v981 = vmin.f32 %v923, 20.0
      %v982 = vmin.f32 %v925, 20.0
      %v983 = vmul.f32 %v979, 1.442695
      %v984 = vpow.pop %v983
      %v985 = vmul.f32 %v980, 1.442695
      %v986 = vpow.pop %v985
      %v987 = vmul.f32 %v981, 1.442695
      %v988 = vpow.pop %v987
      %v989 = vmul.f32 %v982, 1.442695
      %v990 = vpow.pop %v989
      %v991 = vadd.f32 %v984, 1.0
      %v992 = vlog2.pop %v991
      %v993 = vmul.f32 %v992, 0.6931472
      %v994 = vmul.f32 -0.5, %v984
      %v995 = vadd.f32 %v994, 1.0
      %v996 = vmul.f32 %v995, %v984
      %v997 = vand.u32 2147483647, %v984
      %vm998 = vcmp.lt.f32.partialorder %v997, 0.0004427343
      %v999 = vsel %vm998, %v996, %v993
      %v1000 = vadd.f32 %v986, 1.0
      %v1001 = vlog2.pop %v1000
      %v1002 = vmul.f32 %v1001, 0.6931472
      %v1003 = vmul.f32 -0.5, %v986
      %v1004 = vadd.f32 %v1003, 1.0
      %v1005 = vmul.f32 %v1004, %v986
      %v1006 = vand.u32 2147483647, %v986
      %vm1007 = vcmp.lt.f32.partialorder %v1006, 0.0004427343
      %v1008 = vsel %vm1007, %v1005, %v1002
      %v1009 = vadd.f32 %v988, 1.0
      %v1010 = vlog2.pop %v1009
      %v1011 = vmul.f32 %v1010, 0.6931472
      %v1012 = vmul.f32 -0.5, %v988
      %v1013 = vadd.f32 %v1012, 1.0
      %v1014 = vmul.f32 %v1013, %v988
      %v1015 = vand.u32 2147483647, %v988
      %vm1016 = vcmp.lt.f32.partialorder %v1015, 0.0004427343
      %v1017 = vsel %vm1016, %v1014, %v1011
      %v1018 = vadd.f32 %v990, 1.0
      %v1019 = vlog2.pop %v1018
      %v1020 = vmul.f32 %v1019, 0.6931472
      %v1021 = vmul.f32 -0.5, %v990
      %v1022 = vadd.f32 %v1021, 1.0
      %v1023 = vmul.f32 %v1022, %v990
      %v1024 = vand.u32 2147483647, %v990
      %vm1025 = vcmp.lt.f32.partialorder %v1024, 0.0004427343
      %v1026 = vsel %vm1025, %v1023, %v1020
      %v1027 = vsel %vm975, %v917, %v999
      %v1028 = vsel %vm976, %v919, %v1008
      %v1029 = vsel %vm977, %v923, %v1017
      %v1030 = vsel %vm978, %v925, %v1026
      %1031 = vst [vmem:[%s370 + $0x10] sm:$0xf0] %v1027
      %1032 = vst [vmem:[%s370 + $0x18] sm:$0xf0] %v1028
      %1033 = vst [vmem:[%s370 + $0x20] sm:$0xff] %v1029
      %1034 = vst [vmem:[%s370 + $0x28] sm:$0xff] %v1030
      %vm1035 = vcmask 1043456
      %v1036 = vsel %vm1035, %v929, -inf
      %v1037 = vrot.slane %v1036, 4
      %v1038 = vmax.f32 %v1036, %v1037
      %v1039 = vrot.slane %v1038, 2
      %v1040 = vmax.f32 %v1038, %v1039
      %v1041 = vrot.slane %v1040, 1
      %v1042 = vmax.f32 %v1040, %v1041
      %v1043 = vsel %vm1035, %v931, -inf
      %v1044 = vrot.slane %v1043, 4
      %v1045 = vmax.f32 %v1043, %v1044
      %v1046 = vrot.slane %v1045, 2
      %v1047 = vmax.f32 %v1045, %v1046
      %v1048 = vrot.slane %v1047, 1
      %v1049 = vmax.f32 %v1047, %v1048
      %v1050 = vsub.f32 %v929, %v1042
      %v1051 = vsub.f32 %v931, %v1049
      %v1052 = vmul.f32 %v1050, 1.442695
      %v1053 = vpow.pop %v1052
      %v1054 = vmul.f32 %v1051, 1.442695
      %v1055 = vpow.pop %v1054
      %v1056 = vsel %vm1035, %v1053, 0.0
      %v1057 = vrot.slane %v1056, 4
      %v1058 = vadd.f32 %v1056, %v1057
      %v1059 = vrot.slane %v1058, 2
      %v1060 = vadd.f32 %v1058, %v1059
      %v1061 = vrot.slane %v1060, 1
      %v1062 = vadd.f32 %v1060, %v1061
      %v1063 = vsel %vm1035, %v1055, 0.0
      %v1064 = vrot.slane %v1063, 4
      %v1065 = vadd.f32 %v1063, %v1064
      %v1066 = vrot.slane %v1065, 2
      %v1067 = vadd.f32 %v1065, %v1066
      %v1068 = vrot.slane %v1067, 1
      %v1069 = vadd.f32 %v1067, %v1068
      %v1070 = vrcp.pop %v1062
      %v1071 = vrcp.pop %v1069
      %v1072 = vmul.f32 %v1053, %v1070
      %v1073 = vmul.f32 %v1055, %v1071
      %1074 = vst [vmem:[%s370 + $0x30] sm:$0xf] %v1072
      %1075 = vst [vmem:[%s370 + $0x38] sm:$0xf] %v1073
      %vm1076 = vcmask 1047556
      %v1077 = vsel %vm1076, %v929, -inf
      %v1078 = vrot.slane %v1077, 4
      %v1079 = vmax.f32 %v1077, %v1078
      %v1080 = vrot.slane %v1079, 2
      %v1081 = vmax.f32 %v1079, %v1080
      %v1082 = vrot.slane %v1081, 1
      %v1083 = vmax.f32 %v1081, %v1082
      %v1084 = vsel %vm1076, %v931, -inf
      %v1085 = vrot.slane %v1084, 4
      %v1086 = vmax.f32 %v1084, %v1085
      %v1087 = vrot.slane %v1086, 2
      %v1088 = vmax.f32 %v1086, %v1087
      %v1089 = vrot.slane %v1088, 1
      %v1090 = vmax.f32 %v1088, %v1089
      %v1091 = vsub.f32 %v929, %v1083
      %v1092 = vsub.f32 %v931, %v1090
      %v1093 = vmul.f32 %v1091, 1.442695
      %v1094 = vpow.pop %v1093
      %v1095 = vmul.f32 %v1092, 1.442695
      %v1096 = vpow.pop %v1095
      %v1099 = vrot.slane %v1094, 4
      %v1100 = vrot.slane %v1096, 4
      %v1103 = vsel %vm1035, %v1099, 0.0
      %v1104 = vrot.slane %v1103, 4
      %v1105 = vadd.f32 %v1103, %v1104
      %v1106 = vrot.slane %v1105, 2
      %v1107 = vadd.f32 %v1105, %v1106
      %v1108 = vrot.slane %v1107, 1
      %v1109 = vadd.f32 %v1107, %v1108
      %v1110 = vsel %vm1035, %v1100, 0.0
      %v1111 = vrot.slane %v1110, 4
      %v1112 = vadd.f32 %v1110, %v1111
      %v1113 = vrot.slane %v1112, 2
      %v1114 = vadd.f32 %v1112, %v1113
      %v1115 = vrot.slane %v1114, 1
      %v1116 = vadd.f32 %v1114, %v1115
      %v1117 = vrcp.pop %v1109
      %v1118 = vrcp.pop %v1116
      %v1119 = vmul.f32 %v1094, %v1117
      %v1120 = vmul.f32 %v1096, %v1118
      %1121 = vst [vmem:[%s370 + $0x30] sm:$0xf0] %v1119
      %1122 = vst [vmem:[%s370 + $0x38] sm:$0xf0] %v1120
      %v1123 = vsel %vm1035, %v935, -inf
      %v1124 = vrot.slane %v1123, 4
      %v1125 = vmax.f32 %v1123, %v1124
      %v1126 = vrot.slane %v1125, 2
      %v1127 = vmax.f32 %v1125, %v1126
      %v1128 = vrot.slane %v1127, 1
      %v1129 = vmax.f32 %v1127, %v1128
      %v1130 = vsel %vm1035, %v937, -inf
      %v1131 = vrot.slane %v1130, 4
      %v1132 = vmax.f32 %v1130, %v1131
      %v1133 = vrot.slane %v1132, 2
      %v1134 = vmax.f32 %v1132, %v1133
      %v1135 = vrot.slane %v1134, 1
      %v1136 = vmax.f32 %v1134, %v1135
      %v1137 = vsub.f32 %v935, %v1129
      %v1138 = vsub.f32 %v937, %v1136
      %v1139 = vmul.f32 %v1137, 1.442695
      %v1140 = vpow.pop %v1139
      %v1141 = vmul.f32 %v1138, 1.442695
      %v1142 = vpow.pop %v1141
      %v1143 = vsel %vm1035, %v1140, 0.0
      %v1144 = vrot.slane %v1143, 4
      %v1145 = vadd.f32 %v1143, %v1144
      %v1146 = vrot.slane %v1145, 2
      %v1147 = vadd.f32 %v1145, %v1146
      %v1148 = vrot.slane %v1147, 1
      %v1149 = vadd.f32 %v1147, %v1148
      %v1150 = vsel %vm1035, %v1142, 0.0
      %v1151 = vrot.slane %v1150, 4
      %v1152 = vadd.f32 %v1150, %v1151
      %v1153 = vrot.slane %v1152, 2
      %v1154 = vadd.f32 %v1152, %v1153
      %v1155 = vrot.slane %v1154, 1
      %v1156 = vadd.f32 %v1154, %v1155
      %v1157 = vrcp.pop %v1149
      %v1158 = vrcp.pop %v1156
      %v1159 = vmul.f32 %v1140, %v1157
      %v1160 = vmul.f32 %v1142, %v1158
      %1161 = vst [vmem:[%s370 + $0x40] sm:$0xf] %v1159
      %1162 = vst [vmem:[%s370 + $0x48] sm:$0xf] %v1160
      %s1163 = smul.u32 2, %s25
      %p1164 = scmp.lt.s32.totalorder %s24, 1
      %s1165 = scalar_select %p1164, %s24, 1
      %p1166 = scmp.lt.s32.totalorder %s1163, 1
      %s1167 = scalar_select %p1166, %s1163, 1
      %s1168 = smul.addr %s1165, 10
      %s1169 = sadd.s32 %s1167, %s1168
      %s1170 = smul.addr %s1169, 8
      %s1171 = scalar_lea.vmem %s9, %s1170
      // Predicated region
      $region57: #{tpu_custom_call.1} parent=55 // pred_check
        %p1172 = pneg %p248
      $region58: #{tpu_custom_call.1} parent=55 // pred_check_branch
        %1174 = sbr.rel (%p1172) target = $region60
      $region59: #{tpu_custom_call.1} parent=55 // pred_region
        %s1175 = smul.u32 2, %s25
      $region60: #{tpu_custom_call.1} parent=55 // pred_fallthru
        _
    $region56: #{tpu_custom_call.1} parent=5 // pred_fallthru
      _
    %p1176 = scmp.le.s32.totalorder 2, %s15
    // Predicated region
    $region61: #{tpu_custom_call.1} parent=5 // pred_check
      %p1177 = pneg %p1176
    $region62: #{tpu_custom_call.1} parent=5 // pred_check_branch
      %1179 = sbr.rel (%p1177) target = $region64
    $region63: #{tpu_custom_call.1} parent=5 // pred_region
      %s1180 = ssub.s32 %s15, 2
      // Predicated region
      $region65: #{tpu_custom_call.1} parent=63 // pred_check
        %p1181 = pneg %p254
      $region66: #{tpu_custom_call.1} parent=63 // pred_check_branch
        %1183 = sbr.rel (%p1181) target = $region68
      $region67: #{tpu_custom_call.1} parent=63 // pred_region
        %s1184 = smul.u32 2, %s27
        %p1185 = scmp.lt.s32.totalorder %s26, 1
        %s1186 = scalar_select %p1185, %s26, 1
        %p1187 = scmp.lt.s32.totalorder %s1184, 1
        %s1188 = scalar_select %p1187, %s1184, 1
        %s1189 = smul.addr %s1186, 10
        %s1190 = sadd.s32 %s1188, %s1189
        %s1191 = smul.addr %s1190, 8
        %s1192 = scalar_lea.vmem %s9, %s1191
      $region68: #{tpu_custom_call.1} parent=63 // pred_fallthru
        _
    $region64: #{tpu_custom_call.1} parent=5 // pred_fallthru
      _
  $region6: #{tpu_custom_call.1} parent=0 // loop_footer
    %s19 = sadd.s32 1, %s15
  $region7: #{tpu_custom_call.1} parent=0 // loop_footer_branch
    %14 = sbr.rel target = $region3
  $region8: #{tpu_custom_call.1} parent=0 // loop_exit
    _

</llo_original>
